<compile_context>
chip_gen: v7x
topology: tpu7x:2x2x1
jax: 0.10.0
libtpu: 0.0.40
codegen_flags: <defaults>
</compile_context>

<pallas_src>
import math
import jax
import jax.numpy as jnp
from jax.experimental import pallas as pl
from jax.experimental.pallas import tpu as pltpu

IN_DIM = 64          # Linear in_features
QK_DIM = 32          # Linear out_features
M_ROWS = 4           # rows of x1 (original example)
M_PAD = 8            # x1 rows padded to a full sublane group
K_ROWS = 32          # rows of x2 (must equal QK_DIM for the matmul chain)
SCALE = math.sqrt(QK_DIM)
DROP_P = 0.5


def _fused_kernel(xs_ref, w_ref, b_ref, mask_ref, out_ref):
    """Entire forward pass in one VMEM-resident kernel (shapes are tiny).

    xs_ref   : (M_PAD + K_ROWS, 64)  rows [0:M_PAD)=x1 (zero padded), [M_PAD:)=x2
    w_ref    : (64, 64)              [wq | wk] packed along the output dim
    b_ref    : (1, 64)               [bq | bk]
    mask_ref : (M_PAD, 32)           dropout keep-mask pre-scaled by 1/(1-p)
    out_ref  : (M_PAD, 64)
    """
    xs = xs_ref[...]                                               # (40, 64)

    # Fused q/k projection: one MXU pass with N=64 instead of two with N=32.
    proj = jnp.dot(xs, w_ref[...],
                   preferred_element_type=jnp.float32) + b_ref[...]  # (40, 64)

    v1 = proj[:M_PAD, :QK_DIM]      # (8, 32)  q-projection of x1 rows
    v2 = proj[M_PAD:, QK_DIM:]      # (32, 32) k-projection of x2 rows

    # scores (matches the reference: q @ k, not q @ k^T) scaled by sqrt(32)
    v3 = jnp.dot(v1, v2, preferred_element_type=jnp.float32)      # (8, 32)
    v4 = v3 * SCALE

    # numerically stable softmax over the last dim
    m = jnp.max(v4, axis=-1, keepdims=True)
    e = jnp.exp(v4 - m)
    s = jnp.sum(e, axis=-1, keepdims=True)
    v5 = e / s

    # dropout: mask already holds keep * (1/(1-p))
    v6 = v5 * mask_ref[...]

    # final matmul against raw x2 rows
    x2 = xs[M_PAD:, :]                                            # (32, 64)
    out_ref[...] = jnp.dot(v6, x2, preferred_element_type=jnp.float32)


def model_forward(x1, x2, wq, bq, wk, bk, drop_key):
    """x1: (M, 64), x2: (32, 64), wq/wk: (64, 32), bq/bk: (1, 32)."""
    M = x1.shape[0]
    assert x2.shape == (K_ROWS, IN_DIM)

    # --- host-side packing (removes per-operand DMA overhead) ---------------
    x1_pad = jnp.zeros((M_PAD, IN_DIM), jnp.float32).at[:M].set(x1)
    xs = jnp.concatenate([x1_pad, x2], axis=0)                    # (40, 64)
    w_slab = jnp.concatenate([wq, wk], axis=1)                    # (64, 64)
    b_slab = jnp.concatenate([bq, bk], axis=1)                    # (1, 64)

    # dropout keep-mask, pre-scaled by 1/(1-p). Generated with jax.random so
    # the kernel contains no TPU-only PRNG primitives (portable to interpret).
    keep = jax.random.bernoulli(drop_key, p=1.0 - DROP_P, shape=(M_PAD, QK_DIM))
    mask = keep.astype(jnp.float32) * (1.0 / (1.0 - DROP_P))

    vmem = pl.BlockSpec(memory_space=pltpu.MemorySpace.VMEM)
    out = pl.pallas_call(
        _fused_kernel,
        out_shape=jax.ShapeDtypeStruct((M_PAD, IN_DIM), jnp.float32),
        in_specs=[vmem, vmem, vmem, vmem],
        out_specs=vmem,
    )(xs, w_slab, b_slab, mask)
    return out[:M]


if __name__ == "__main__":
    key = jax.random.PRNGKey(0)
    k_x1, k_x2, k_wq, k_bq, k_wk, k_bk, k_drop = jax.random.split(key, 7)

    x1 = jax.random.normal(k_x1, (M_ROWS, IN_DIM), dtype=jnp.float32)
    x2 = jax.random.normal(k_x2, (K_ROWS, IN_DIM), dtype=jnp.float32)

    # Deterministic parameter init (mimics nn.Linear uniform(-1/sqrt(in), 1/sqrt(in)))
    bound = 1.0 / math.sqrt(IN_DIM)
    wq = jax.random.uniform(k_wq, (IN_DIM, QK_DIM), jnp.float32, -bound, bound)
    bq = jax.random.uniform(k_bq, (1, QK_DIM), jnp.float32, -bound, bound)
    wk = jax.random.uniform(k_wk, (IN_DIM, QK_DIM), jnp.float32, -bound, bound)
    bk = jax.random.uniform(k_bk, (1, QK_DIM), jnp.float32, -bound, bound)

    out = model_forward(x1, x2, wq, bq, wk, bk, k_drop)
    jax.block_until_ready(out)
    assert out.shape == (M_ROWS, IN_DIM)
    assert bool(jnp.all(jnp.isfinite(out)))
    print("KERNEL_OK")
</pallas_src>

<mosaic_0001>
module attributes {stable_mosaic.version = 11 : i64} {
  func.func @_fused_kernel(%arg0: memref<40x64xf32, #tpu.memory_space<vmem>>, %arg1: memref<64x64xf32, #tpu.memory_space<vmem>>, %arg2: memref<1x64xf32, #tpu.memory_space<vmem>>, %arg3: memref<8x32xf32, #tpu.memory_space<vmem>>, %arg4: memref<8x64xf32, #tpu.memory_space<vmem>>) attributes {dimension_semantics = [], scalar_prefetch = 0 : i64, scratch_operands = 0 : i64, tpu.core_type = #tpu.core_type<tc>} {
    %c0 = arith.constant 0 : index
    %c0_0 = arith.constant 0 : index
    %0 = vector.load %arg0[%c0, %c0_0] : memref<40x64xf32, #tpu.memory_space<vmem>>, vector<40x64xf32>
    %c0_1 = arith.constant 0 : index
    %c0_2 = arith.constant 0 : index
    %1 = vector.load %arg1[%c0_1, %c0_2] : memref<64x64xf32, #tpu.memory_space<vmem>>, vector<64x64xf32>
    %cst = arith.constant dense<0.000000e+00> : vector<40x64xf32>
    %2 = tpu.matmul %0, %1, %cst {dimension_numbers = #tpu.dot_dimension_numbers<[1], [0], [0], [1], [0, 0, 1, 1], [], []>} : vector<40x64xf32>, vector<64x64xf32>, vector<40x64xf32> -> vector<40x64xf32>
    %c0_3 = arith.constant 0 : index
    %c0_4 = arith.constant 0 : index
    %3 = vector.load %arg2[%c0_3, %c0_4] : memref<1x64xf32, #tpu.memory_space<vmem>>, vector<1x64xf32>
    %4 = vector.broadcast %3 : vector<1x64xf32> to vector<40x64xf32>
    %5 = arith.addf %2, %4 : vector<40x64xf32>
    %6 = vector.extract_strided_slice %5 {offsets = [0, 0], sizes = [8, 32], strides = [1, 1]} : vector<40x64xf32> to vector<8x32xf32>
    %7 = vector.extract_strided_slice %5 {offsets = [8, 32], sizes = [32, 32], strides = [1, 1]} : vector<40x64xf32> to vector<32x32xf32>
    %cst_5 = arith.constant dense<0.000000e+00> : vector<8x32xf32>
    %8 = tpu.matmul %6, %7, %cst_5 {dimension_numbers = #tpu.dot_dimension_numbers<[1], [0], [0], [1], [0, 0, 1, 1], [], []>} : vector<8x32xf32>, vector<32x32xf32>, vector<8x32xf32> -> vector<8x32xf32>
    %cst_6 = arith.constant 5.65685415 : f32
    %9 = vector.broadcast %cst_6 : f32 to vector<8x32xf32>
    %10 = arith.mulf %8, %9 : vector<8x32xf32>
    %cst_7 = arith.constant dense<0xFF800000> : vector<8xf32>
    %11 = vector.multi_reduction <maximumf>, %10, %cst_7 [1] : vector<8x32xf32> to vector<8xf32>
    %12 = vector.shape_cast %11 : vector<8xf32> to vector<8x1xf32>
    %13 = vector.broadcast %12 : vector<8x1xf32> to vector<8x32xf32>
    %14 = arith.subf %10, %13 : vector<8x32xf32>
    %15 = math.exp %14 : vector<8x32xf32>
    %cst_8 = arith.constant dense<0.000000e+00> : vector<8xf32>
    %16 = vector.multi_reduction <add>, %15, %cst_8 [1] : vector<8x32xf32> to vector<8xf32>
    %17 = vector.shape_cast %16 : vector<8xf32> to vector<8x1xf32>
    %18 = vector.broadcast %17 : vector<8x1xf32> to vector<8x32xf32>
    %19 = arith.divf %15, %18 : vector<8x32xf32>
    %c0_9 = arith.constant 0 : index
    %c0_10 = arith.constant 0 : index
    %20 = vector.load %arg3[%c0_9, %c0_10] : memref<8x32xf32, #tpu.memory_space<vmem>>, vector<8x32xf32>
    %21 = arith.mulf %19, %20 : vector<8x32xf32>
    %22 = vector.extract_strided_slice %0 {offsets = [8, 0], sizes = [32, 64], strides = [1, 1]} : vector<40x64xf32> to vector<32x64xf32>
    %cst_11 = arith.constant dense<0.000000e+00> : vector<8x64xf32>
    %23 = tpu.matmul %21, %22, %cst_11 {dimension_numbers = #tpu.dot_dimension_numbers<[1], [0], [0], [1], [0, 0, 1, 1], [], []>} : vector<8x32xf32>, vector<32x64xf32>, vector<8x64xf32> -> vector<8x64xf32>
    %c0_12 = arith.constant 0 : index
    %c0_13 = arith.constant 0 : index
    %24 = vector.load %arg4[%c0_12, %c0_13] : memref<8x64xf32, #tpu.memory_space<vmem>>, vector<8x64xf32>
    tpu.vector_store %arg4[%c0_12, %c0_13], %23 {strides = array<i32>} : memref<8x64xf32, #tpu.memory_space<vmem>>, vector<8x64xf32>,
    return
  }
}

</mosaic_0001>

<llo_original>
// kernel: tpu_custom_call.1
$region0: #{tpu_custom_call.1}
  #allocation0 [shape = 'u32[]', space=smem, size = 0x4, offset = 0x4, fixed_abs, tag = 'smem constant byte address 0x4 - core index']
  #allocation1 [shape = 'u32[144,128]{1,0:T(1,128)}', space=vmem, size = 0x12000, scoped, tag = 'internal scratch']
  %s0 = inlined_call_operand.hbm [shape: f32[40,64], index: 0, kind: input, shape index: {}]
  %s1 = inlined_call_operand.hbm [shape: f32[64,64], index: 1, kind: input, shape index: {}]
  %s2 = inlined_call_operand.vmem [shape: f32[1,64], index: 2, kind: input, shape index: {}]
  %s3 = inlined_call_operand.vmem [shape: f32[8,32], index: 3, kind: input, shape index: {}]
  %s4 = inlined_call_operand.hbm [shape: f32[8,64], index: 4, kind: output, shape index: {}]
  %s5 = sld [smem:[#allocation0]]
  $region34: #{tpu_custom_call.1} parent=0
    _
  %s7 = ssub.s32 1, %s5
  %s8 = scalar_select 0, %s7, %s5
  $region1: #{tpu_custom_call.1} parent=0
    #allocation2 [shape = 'u8[20480]{0}', space=vmem, size = 0x5000, scoped, tag = 'input window, operand 0, single buffered']
    #allocation3 [shape = 's32[1]{0}', space=sflag, size = 0x4, scoped, tag = 'scoped memory for tpu_custom_call.1']
    #allocation4 [shape = 's32[1]{0}', space=sflag, size = 0x4, scoped, tag = 'scoped memory for tpu_custom_call.1']
    #allocation5 [shape = 'u8[32768]{0}', space=vmem, size = 0x8000, scoped, tag = 'input window, operand 1, single buffered']
    #allocation6 [shape = 's32[1]{0}', space=sflag, size = 0x4, scoped, tag = 'scoped memory for tpu_custom_call.1']
    #allocation7 [shape = 'u8[4096]{0}', space=vmem, size = 0x1000, scoped, tag = 'output window, operand 0, single buffered']
    %9 = vsyncpa [#allocation3], 0
    %10 = vsyncpa [#allocation6], 0
    %11 = vsyncpa [#allocation4], 0
    // Predicated region
    $region2: #{tpu_custom_call.1} parent=1 // pred_check
      _
    $region3: #{tpu_custom_call.1} parent=1 // pred_check_branch
      %13 = sbr.rel (0) target = $region5
    $region4: #{tpu_custom_call.1} parent=1 // pred_region
      %s15 = ssub.s32 640, 640
      %16 = vsyncadd [#allocation3], %s15
      %s17 = sshll.u32 [#allocation2], 4
      %s18 = int_to_ptr.vmem [resolvable:$true] %s17
      %23 = dma.hbm_to_vmem [thread:$0]  %s0, 640, %s18, [#allocation3], 128, 128, 8
    $region5: #{tpu_custom_call.1} parent=1 // pred_fallthru
      _
    // Predicated region
    $region6: #{tpu_custom_call.1} parent=1 // pred_check
      _
    $region7: #{tpu_custom_call.1} parent=1 // pred_check_branch
      %25 = sbr.rel (0) target = $region9
    $region8: #{tpu_custom_call.1} parent=1 // pred_region
      %s27 = ssub.s32 1024, 1024
      %28 = vsyncadd [#allocation6], %s27
      %s29 = sshll.u32 [#allocation5], 4
      %s30 = int_to_ptr.vmem [resolvable:$true] %s29
      %35 = dma.hbm_to_vmem [thread:$0]  %s1, 1024, %s30, [#allocation6], 128, 128, 8
    $region9: #{tpu_custom_call.1} parent=1 // pred_fallthru
      _
    // Predicated region
    $region10: #{tpu_custom_call.1} parent=1 // pred_check
      _
    $region11: #{tpu_custom_call.1} parent=1 // pred_check_branch
      %37 = sbr.rel (0) target = $region13
    $region12: #{tpu_custom_call.1} parent=1 // pred_region
      _
    $region13: #{tpu_custom_call.1} parent=1 // pred_fallthru
      _
    // Predicated region
    $region14: #{tpu_custom_call.1} parent=1 // pred_check
      _
    $region15: #{tpu_custom_call.1} parent=1 // pred_check_branch
      %39 = sbr.rel (0) target = $region17
    $region16: #{tpu_custom_call.1} parent=1 // pred_region
      _
    $region17: #{tpu_custom_call.1} parent=1 // pred_fallthru
      _
    // Predicated region
    $region18: #{tpu_custom_call.1} parent=1 // pred_check
      _
    $region19: #{tpu_custom_call.1} parent=1 // pred_check_branch
      %41 = sbr.rel (0) target = $region21
    $region20: #{tpu_custom_call.1} parent=1 // pred_region
      %42 = dma.done [#allocation3], 640
    $region21: #{tpu_custom_call.1} parent=1 // pred_fallthru
      _
    // Predicated region
    $region22: #{tpu_custom_call.1} parent=1 // pred_check
      _
    $region23: #{tpu_custom_call.1} parent=1 // pred_check_branch
      %44 = sbr.rel (0) target = $region25
    $region24: #{tpu_custom_call.1} parent=1 // pred_region
      %45 = dma.done [#allocation6], 1024
    $region25: #{tpu_custom_call.1} parent=1 // pred_fallthru
      _
    %v46 = vld [vmem:[#allocation2] sm:$0xff]
    %v47 = vld [vmem:[#allocation2 + $0x8] sm:$0xff]
    %v48 = vld [vmem:[#allocation2 + $0x10] sm:$0xff]
    %v49 = vld [vmem:[#allocation2 + $0x18] sm:$0xff]
    %v50 = vld [vmem:[#allocation2 + $0x20] sm:$0xff]
    %v51 = vld [vmem:[#allocation5] sm:$0xff]
    %v52 = vld [vmem:[#allocation5 + $0x8] sm:$0xff]
    %v53 = vld [vmem:[#allocation5 + $0x10] sm:$0xff]
    %v54 = vld [vmem:[#allocation5 + $0x18] sm:$0xff]
    %v55 = vld [vmem:[#allocation5 + $0x20] sm:$0xff]
    %v56 = vld [vmem:[#allocation5 + $0x28] sm:$0xff]
    %v57 = vld [vmem:[#allocation5 + $0x30] sm:$0xff]
    %v58 = vld [vmem:[#allocation5 + $0x38] sm:$0xff]
    %v59 = vld [vmem:[%s2] sm:$0x1]
    %v61 = vlaneseq
    %v62 = vshrl.u32 %v61, 7
    %v63 = vsub.s32 0, %v62
    %v64 = vrot.slane %v59, %v63
    %vm66 = vcmask 523264
    %v68 = vsel %vm66, %v46, 0
    %v71 = vsel %vm66, %v47, 0
    %v74 = vsel %vm66, %v48, 0
    %v77 = vsel %vm66, %v49, 0
    %v80 = vsel %vm66, %v50, 0
    %82 = vmatprep.subr.mxu0 0.0
    %83 = vmatpush1.msra.mxu0 %v51
    %84 = vmatprep.subr.mxu0 0.0
    %85 = vmatpush1.msra.mxu0 %v52
    %86 = vmatprep.subr.mxu0 0.0
    %87 = vmatpush1.msra.mxu0 %v53
    %88 = vmatprep.subr.mxu0 0.0
    %89 = vmatpush1.msra.mxu0 %v54
    %90 = vmatprep.subr.mxu0 0.0
    %91 = vmatpush1.msra.mxu0 %v55
    %92 = vmatprep.subr.mxu0 0.0
    %93 = vmatpush1.msra.mxu0 %v56
    %94 = vmatprep.subr.mxu0 0.0
    %95 = vmatpush1.msra.mxu0 %v57
    %96 = vmatprep.subr.mxu0 0.0
    %97 = vmatpush1.msra.mxu0 %v58
    %98 = vmatprep.subr.mxu0 0.0
    %99 = vmatpush1.msra.mxu0 0.0
    %100 = vmatprep.subr.mxu0 0.0
    %101 = vmatpush1.msra.mxu0 0.0
    %102 = vmatprep.subr.mxu0 0.0
    %103 = vmatpush1.msra.mxu0 0.0
    %104 = vmatprep.subr.mxu0 0.0
    %105 = vmatpush1.msra.mxu0 0.0
    %106 = vmatprep.subr.mxu0 0.0
    %107 = vmatpush1.msra.mxu0 0.0
    %108 = vmatprep.subr.mxu0 0.0
    %109 = vmatpush1.msra.mxu0 0.0
    %110 = vmatprep.subr.mxu0 0.0
    %111 = vmatpush1.msra.mxu0 0.0
    %112 = vmatprep.subr.mxu0 0.0
    %113 = vmatpush1.msra.mxu0 0.0
    %114 = vmatprep.subr.mxu0 0.0
    %115 = vmatpush1.msra.mxu0 0.0
    %116 = vmatprep.subr.mxu0 0.0
    %117 = vmatpush1.msra.mxu0 0.0
    %118 = vmatprep.subr.mxu0 0.0
    %119 = vmatpush1.msra.mxu0 0.0
    %120 = vmatprep.subr.mxu0 0.0
    %121 = vmatpush1.msra.mxu0 0.0
    %122 = vmatprep.subr.mxu0 0.0
    %123 = vmatpush1.msra.mxu0 0.0
    %124 = vmatprep.subr.mxu0 0.0
    %125 = vmatpush1.msra.mxu0 0.0
    %126 = vmatprep.subr.mxu0 0.0
    %127 = vmatpush1.msra.mxu0 0.0
    %128 = vmatprep.subr.mxu0 0.0
    %129 = vmatpush1.msra.mxu0 0.0
    %130 = vmatprep.subr.mxu0 0.0
    %131 = vmatpush1.msra.mxu0 0.0
    %132 = vmatprep.subr.mxu0 0.0
    %133 = vmatpush1.msra.mxu0 0.0
    %134 = vmatprep.subr.mxu0 0.0
    %135 = vmatpush1.msra.mxu0 0.0
    %136 = vmatprep.subr.mxu0 0.0
    %137 = vmatpush1.msra.mxu0 0.0
    %138 = vmatprep.subr.mxu0 0.0
    %139 = vmatpush1.msra.mxu0 0.0
    %140 = vmatprep.subr.mxu0 0.0
    %141 = vmatpush1.msra.mxu0 0.0
    %142 = vmatprep.subr.mxu0 0.0
    %143 = vmatpush1.msra.mxu0 0.0
    %144 = vmatprep.subr.mxu0 0.0
    %145 = vmatpush1.msra.mxu0 0.0
    %146 = vmatprep.mubr.f32.mxu0 0.0
    %147 = vmatmul.mubr.f32.gmra.mrb[0].mxu0 %v68
    %v148 = vpop.f32.mrb[0].mxu0
    %v149 = vadd.f32 %v64, %v148
    %v150 = vpop.f32.mrb[0].mxu0
    %151 = vmatprep.mubr.f32.mxu0 0.0
    %152 = vmatmul.mubr.f32.gmra.mrb[0].mxu0 %v71
    %v153 = vpop.f32.mrb[0].mxu0
    %v154 = vadd.f32 %v64, %v153
    %v155 = vpop.f32.mrb[0].mxu0
    %156 = vmatprep.mubr.f32.mxu0 0.0
    %157 = vmatmul.mubr.f32.gmra.mrb[0].mxu0 %v74
    %v158 = vpop.f32.mrb[0].mxu0
    %v159 = vadd.f32 %v64, %v158
    %v160 = vpop.f32.mrb[0].mxu0
    %161 = vmatprep.mubr.f32.mxu0 0.0
    %162 = vmatmul.mubr.f32.gmra.mrb[0].mxu0 %v77
    %v163 = vpop.f32.mrb[0].mxu0
    %v164 = vadd.f32 %v64, %v163
    %v165 = vpop.f32.mrb[0].mxu0
    %166 = vmatprep.mubr.f32.mxu0 0.0
    %167 = vmatmul.mubr.f32.gmra.mrb[0].mxu0 %v80
    %v168 = vpop.f32.mrb[0].mxu0
    %v169 = vadd.f32 %v64, %v168
    %v170 = vpop.f32.mrb[0].mxu0
    %171 = vdwg.mxu0
    %176 = vrot.lane.b32.xlu0 %v154, 96
    %v177 = vpop.permute.xlu0 %176
    %178 = vrot.lane.b32.xlu0 %v159, 96
    %v179 = vpop.permute.xlu0 %178
    %180 = vrot.lane.b32.xlu0 %v164, 96
    %v181 = vpop.permute.xlu0 %180
    %182 = vrot.lane.b32.xlu0 %v169, 96
    %v183 = vpop.permute.xlu0 %182
    %vm188 = vcmask 261120
    %v190 = vsel %vm188, %v149, 0
    %192 = vmatprep.subr.mxu0 0.0
    %193 = vmatpush1.msra.mxu0 %v177
    %194 = vmatprep.subr.mxu0 0.0
    %195 = vmatpush1.msra.mxu0 %v179
    %196 = vmatprep.subr.mxu0 0.0
    %197 = vmatpush1.msra.mxu0 %v181
    %198 = vmatprep.subr.mxu0 0.0
    %199 = vmatpush1.msra.mxu0 %v183
    %200 = vmatprep.subr.mxu0 0.0
    %201 = vmatpush1.msra.mxu0 0.0
    %202 = vmatprep.subr.mxu0 0.0
    %203 = vmatpush1.msra.mxu0 0.0
    %204 = vmatprep.subr.mxu0 0.0
    %205 = vmatpush1.msra.mxu0 0.0
    %206 = vmatprep.subr.mxu0 0.0
    %207 = vmatpush1.msra.mxu0 0.0
    %208 = vmatprep.subr.mxu0 0.0
    %209 = vmatpush1.msra.mxu0 0.0
    %210 = vmatprep.subr.mxu0 0.0
    %211 = vmatpush1.msra.mxu0 0.0
    %212 = vmatprep.subr.mxu0 0.0
    %213 = vmatpush1.msra.mxu0 0.0
    %214 = vmatprep.subr.mxu0 0.0
    %215 = vmatpush1.msra.mxu0 0.0
    %216 = vmatprep.subr.mxu0 0.0
    %217 = vmatpush1.msra.mxu0 0.0
    %218 = vmatprep.subr.mxu0 0.0
    %219 = vmatpush1.msra.mxu0 0.0
    %220 = vmatprep.subr.mxu0 0.0
    %221 = vmatpush1.msra.mxu0 0.0
    %222 = vmatprep.subr.mxu0 0.0
    %223 = vmatpush1.msra.mxu0 0.0
    %224 = vmatprep.subr.mxu0 0.0
    %225 = vmatpush1.msra.mxu0 0.0
    %226 = vmatprep.subr.mxu0 0.0
    %227 = vmatpush1.msra.mxu0 0.0
    %228 = vmatprep.subr.mxu0 0.0
    %229 = vmatpush1.msra.mxu0 0.0
    %230 = vmatprep.subr.mxu0 0.0
    %231 = vmatpush1.msra.mxu0 0.0
    %232 = vmatprep.subr.mxu0 0.0
    %233 = vmatpush1.msra.mxu0 0.0
    %234 = vmatprep.subr.mxu0 0.0
    %235 = vmatpush1.msra.mxu0 0.0
    %236 = vmatprep.subr.mxu0 0.0
    %237 = vmatpush1.msra.mxu0 0.0
    %238 = vmatprep.subr.mxu0 0.0
    %239 = vmatpush1.msra.mxu0 0.0
    %240 = vmatprep.subr.mxu0 0.0
    %241 = vmatpush1.msra.mxu0 0.0
    %242 = vmatprep.subr.mxu0 0.0
    %243 = vmatpush1.msra.mxu0 0.0
    %244 = vmatprep.subr.mxu0 0.0
    %245 = vmatpush1.msra.mxu0 0.0
    %246 = vmatprep.subr.mxu0 0.0
    %247 = vmatpush1.msra.mxu0 0.0
    %248 = vmatprep.subr.mxu0 0.0
    %249 = vmatpush1.msra.mxu0 0.0
    %250 = vmatprep.subr.mxu0 0.0
    %251 = vmatpush1.msra.mxu0 0.0
    %252 = vmatprep.subr.mxu0 0.0
    %253 = vmatpush1.msra.mxu0 0.0
    %254 = vmatprep.subr.mxu0 0.0
    %255 = vmatpush1.msra.mxu0 0.0
    %256 = vmatprep.mubr.f32.mxu0 0.0
    %257 = vmatmul.mubr.f32.gmra.mrb[0].mxu0 %v190
    %v258 = vpop.f32.mrb[0].mxu0
    %v259 = vadd.f32 0.0, %v258
    %v260 = vpop.f32.mrb[0].mxu0
    %261 = vdwg.mxu0
    %v262 = vmul.f32 %v259, 5.656854
    %v263 = vsel %vm188, %v262, -inf
    %264 = vmax.xlane.f32.xlu0 %v263
    %v265 = vpop.xlane.xlu0 %264
    %v266 = vsub.f32 %v262, %v265
    %v267 = vmul.f32 %v266, 1.442695
    %v268 = vpow.pop %v267
    %v269 = vsel %vm188, %v268, 0.0
    %270 = vadd.xlane.f32.xlu0 %v269
    %v271 = vpop.xlane.xlu0 %270
    %v272 = vrcp.pop %v271
    %v273 = vmul.f32 %v268, %v272
    %v274 = vld [vmem:[%s3] sm:$0xff]
    %v275 = vmul.f32 %v273, %v274
    %v277 = vsel %vm188, %v275, 0
    %279 = vmatprep.subr.mxu0 0.0
    %280 = vmatpush1.msra.mxu0 %v47
    %281 = vmatprep.subr.mxu0 0.0
    %282 = vmatpush1.msra.mxu0 %v48
    %283 = vmatprep.subr.mxu0 0.0
    %284 = vmatpush1.msra.mxu0 %v49
    %285 = vmatprep.subr.mxu0 0.0
    %286 = vmatpush1.msra.mxu0 %v50
    %287 = vmatprep.subr.mxu0 0.0
    %288 = vmatpush1.msra.mxu0 0.0
    %289 = vmatprep.subr.mxu0 0.0
    %290 = vmatpush1.msra.mxu0 0.0
    %291 = vmatprep.subr.mxu0 0.0
    %292 = vmatpush1.msra.mxu0 0.0
    %293 = vmatprep.subr.mxu0 0.0
    %294 = vmatpush1.msra.mxu0 0.0
    %295 = vmatprep.subr.mxu0 0.0
    %296 = vmatpush1.msra.mxu0 0.0
    %297 = vmatprep.subr.mxu0 0.0
    %298 = vmatpush1.msra.mxu0 0.0
    %299 = vmatprep.subr.mxu0 0.0
    %300 = vmatpush1.msra.mxu0 0.0
    %301 = vmatprep.subr.mxu0 0.0
    %302 = vmatpush1.msra.mxu0 0.0
    %303 = vmatprep.subr.mxu0 0.0
    %304 = vmatpush1.msra.mxu0 0.0
    %305 = vmatprep.subr.mxu0 0.0
    %306 = vmatpush1.msra.mxu0 0.0
    %307 = vmatprep.subr.mxu0 0.0
    %308 = vmatpush1.msra.mxu0 0.0
    %309 = vmatprep.subr.mxu0 0.0
    %310 = vmatpush1.msra.mxu0 0.0
    %311 = vmatprep.subr.mxu0 0.0
    %312 = vmatpush1.msra.mxu0 0.0
    %313 = vmatprep.subr.mxu0 0.0
    %314 = vmatpush1.msra.mxu0 0.0
    %315 = vmatprep.subr.mxu0 0.0
    %316 = vmatpush1.msra.mxu0 0.0
    %317 = vmatprep.subr.mxu0 0.0
    %318 = vmatpush1.msra.mxu0 0.0
    %319 = vmatprep.subr.mxu0 0.0
    %320 = vmatpush1.msra.mxu0 0.0
    %321 = vmatprep.subr.mxu0 0.0
    %322 = vmatpush1.msra.mxu0 0.0
    %323 = vmatprep.subr.mxu0 0.0
    %324 = vmatpush1.msra.mxu0 0.0
    %325 = vmatprep.subr.mxu0 0.0
    %326 = vmatpush1.msra.mxu0 0.0
    %327 = vmatprep.subr.mxu0 0.0
    %328 = vmatpush1.msra.mxu0 0.0
    %329 = vmatprep.subr.mxu0 0.0
    %330 = vmatpush1.msra.mxu0 0.0
    %331 = vmatprep.subr.mxu0 0.0
    %332 = vmatpush1.msra.mxu0 0.0
    %333 = vmatprep.subr.mxu0 0.0
    %334 = vmatpush1.msra.mxu0 0.0
    %335 = vmatprep.subr.mxu0 0.0
    %336 = vmatpush1.msra.mxu0 0.0
    %337 = vmatprep.subr.mxu0 0.0
    %338 = vmatpush1.msra.mxu0 0.0
    %339 = vmatprep.subr.mxu0 0.0
    %340 = vmatpush1.msra.mxu0 0.0
    %341 = vmatprep.subr.mxu0 0.0
    %342 = vmatpush1.msra.mxu0 0.0
    %343 = vmatprep.mubr.f32.mxu0 0.0
    %344 = vmatmul.mubr.f32.gmra.mrb[0].mxu0 %v277
    %v345 = vpop.f32.mrb[0].mxu0
    %v346 = vadd.f32 0.0, %v345
    %v347 = vpop.f32.mrb[0].mxu0
    %348 = vdwg.mxu0
    %349 = vst.msk [vmem:[#allocation7] sm:$0xff] %vm66, %v346
    // Predicated region
    $region26: #{tpu_custom_call.1} parent=1 // pred_check
      _
    $region27: #{tpu_custom_call.1} parent=1 // pred_check_branch
      %351 = sbr.rel (0) target = $region29
    $region28: #{tpu_custom_call.1} parent=1 // pred_region
      %s353 = ssub.s32 128, 128
      %354 = vsyncadd [#allocation4], %s353
      %s356 = sshll.u32 [#allocation7], 4
      %s357 = int_to_ptr.vmem [resolvable:$true] %s356
      %359 = dma.vmem_to_hbm [thread:$0]  %s357, 128, %s4, [#allocation4]
    $region29: #{tpu_custom_call.1} parent=1 // pred_fallthru
      _
    // Predicated region
    $region30: #{tpu_custom_call.1} parent=1 // pred_check
      _
    $region31: #{tpu_custom_call.1} parent=1 // pred_check_branch
      %361 = sbr.rel (0) target = $region33
    $region32: #{tpu_custom_call.1} parent=1 // pred_region
      %362 = dma.done [#allocation4], 128
    $region33: #{tpu_custom_call.1} parent=1 // pred_fallthru
      _
    %363 = vsyncpa [#allocation3], 1
    %364 = vsyncpa [#allocation6], 1
    %365 = vsyncpa [#allocation4], 1

</llo_original>
